<compile_context>
chip_gen: v7x
topology: tpu7x:2x2x1
jax: 0.10.0
libtpu: 0.0.40
codegen_flags: <defaults>
</compile_context>

<pallas_src>
import functools
import math

import jax
import jax.numpy as jnp
from jax.experimental import pallas as pl
from jax.experimental.pallas import tpu as pltpu

N_LAYERS = 2            # args.layers
LEAKY_ALPHA = 0.2       # args.alpha
_VMEM_LIMIT = 48 * 1024 * 1024


def _round_up(x, m):
    return (x + m - 1) // m * m


def _lcm(a, b):
    return a * b // math.gcd(a, b)


def _pad2d(a, rows, cols):
    pr, pc = rows - a.shape[0], cols - a.shape[1]
    if pr or pc:
        a = jnp.pad(a, ((0, pr), (0, pc)))
    return a


# --------------------------------------------------------------------------
# Kernel 1: one LightGCN layer (tiled bf16 SpMM, f32 accumulation)
# --------------------------------------------------------------------------
def _spmm_layer_kernel(adj_ref, x_ref, out_ref, acc_ref):
    k = pl.program_id(1)

    @pl.when(k == 0)
    def _():
        acc_ref[...] = jnp.zeros(acc_ref.shape, jnp.float32)

    acc_ref[...] += jnp.dot(adj_ref[...], x_ref[...],
                            preferred_element_type=jnp.float32)

    @pl.when(k == pl.num_programs(1) - 1)
    def _():
        out_ref[...] = acc_ref[...]


def lightgcn_layer(adj_bf16, x_bf16, *, tm=256, tk=256):
    n, d = x_bf16.shape
    assert adj_bf16.shape == (n, n) and n % tm == 0 and n % tk == 0
    return pl.pallas_call(
        _spmm_layer_kernel,
        out_shape=jax.ShapeDtypeStruct((n, d), jnp.float32),
        grid=(n // tm, n // tk),
        in_specs=[pl.BlockSpec((tm, tk), lambda i, k: (i, k)),   # adjacency stream
                  pl.BlockSpec((tk, d), lambda i, k: (k, 0))],   # embedding slab
        out_specs=pl.BlockSpec((tm, d), lambda i, k: (i, 0)),
        scratch_shapes=[pltpu.VMEM((tm, d), jnp.float32)],
        compiler_params=pltpu.CompilerParams(
            dimension_semantics=("parallel", "arbitrary"),
            vmem_limit_bytes=_VMEM_LIMIT),
    )(adj_bf16, x_bf16)


# --------------------------------------------------------------------------
# Kernel 2: streamed single-head social GAT + (user + social)/2 combine
#           (flash-attention-style online masked softmax)
# --------------------------------------------------------------------------
def _gat_social_kernel(xq_ref, xk_ref, adj_ref, w_ref, asrc_ref, adst_ref,
                       out_ref, m_ref, l_ref, acc_ref, *, alpha):
    ki = pl.program_id(1)

    @pl.when(ki == 0)
    def _():
        m_ref[...] = jnp.full(m_ref.shape, -jnp.inf, dtype=jnp.float32)
        l_ref[...] = jnp.zeros(l_ref.shape, jnp.float32)
        acc_ref[...] = jnp.zeros(acc_ref.shape, jnp.float32)

    w = w_ref[...]
    # Query / key projections.  D is small, so recomputing the query
    # projection per key tile is cheap; hoist to a ki==0 scratch if D grows.
    hq = jnp.dot(xq_ref[...], w, preferred_element_type=jnp.float32)      # (tq, D)
    hk = jnp.dot(xk_ref[...], w, preferred_element_type=jnp.float32)      # (tk, D)
    fq = jnp.dot(hq, asrc_ref[...], preferred_element_type=jnp.float32)   # (tq, 1)
    fk = jax.lax.dot_general(adst_ref[...], hk, (((1,), (1,)), ((), ())),
                             preferred_element_type=jnp.float32)          # (1, tk)

    # additive attention logits e_ij = LeakyReLU(a_src.h_i + a_dst.h_j)
    e = fq + fk                                                           # (tq, tk)
    e = jnp.where(e > 0, e, alpha * e)                                    # LeakyReLU
    e = jnp.where(adj_ref[...] > 0, e, jnp.float32(-1e9))                 # neighbor mask

    # online masked softmax update
    m_prev = m_ref[...]
    m_new = jnp.maximum(m_prev, jnp.max(e, axis=-1, keepdims=True))
    corr = jnp.exp(m_prev - m_new)
    p = jnp.exp(e - m_new)
    l_ref[...] = corr * l_ref[...] + jnp.sum(p, axis=-1, keepdims=True)
    acc_ref[...] = corr * acc_ref[...] + jnp.dot(
        p, hk, preferred_element_type=jnp.float32)
    m_ref[...] = m_new

    @pl.when(ki == pl.num_programs(1) - 1)
    def _():
        social = acc_ref[...] * pl.reciprocal(l_ref[...], approx=True)
        social = jnp.where(social > 0, social, jnp.expm1(social))         # ELU
        out_ref[...] = 0.5 * (xq_ref[...] + social)


def gat_social_combine(all_emb, social_bf16, w, a_src, a_dst, *,
                       tq=128, tk=128, alpha=LEAKY_ALPHA):
    u_pad = social_bf16.shape[0]
    d = all_emb.shape[1]
    assert u_pad % tq == 0 and u_pad % tk == 0
    assert all_emb.shape[0] >= u_pad
    return pl.pallas_call(
        functools.partial(_gat_social_kernel, alpha=alpha),
        out_shape=jax.ShapeDtypeStruct((u_pad, d), jnp.float32),
        grid=(u_pad // tq, u_pad // tk),
        in_specs=[pl.BlockSpec((tq, d), lambda qi, ki: (qi, 0)),    # query users
                  pl.BlockSpec((tk, d), lambda qi, ki: (ki, 0)),    # key users
                  pl.BlockSpec((tq, tk), lambda qi, ki: (qi, ki)),  # social adj tile
                  pl.BlockSpec((d, d), lambda qi, ki: (0, 0)),      # W
                  pl.BlockSpec((d, 1), lambda qi, ki: (0, 0)),      # a_src
                  pl.BlockSpec((1, d), lambda qi, ki: (0, 0))],     # a_dst
        out_specs=pl.BlockSpec((tq, d), lambda qi, ki: (qi, 0)),
        scratch_shapes=[pltpu.VMEM((tq, 1), jnp.float32),   # running max m
                        pltpu.VMEM((tq, 1), jnp.float32),   # running denom l
                        pltpu.VMEM((tq, d), jnp.float32)],  # running acc
        compiler_params=pltpu.CompilerParams(
            dimension_semantics=("parallel", "arbitrary"),
            vmem_limit_bytes=_VMEM_LIMIT),
    )(all_emb, all_emb, social_bf16, w, a_src, a_dst)


# --------------------------------------------------------------------------
# MBSoc.forward (behavior_adj=None path) glue
# --------------------------------------------------------------------------
def mbsoc_forward(params, graph, social_graph, num_users,
                  n_layers=N_LAYERS, alpha=LEAKY_ALPHA,
                  tm=256, tk=256, tq=128, tk_gat=128):
    num_items = params["item_emb"].shape[0]
    n = num_users + num_items
    d = params["user_emb"].shape[1]

    # ---- LightGCN propagation: n_layers tiled bf16 SpMM passes ----
    ego = jnp.concatenate([params["user_emb"], params["item_emb"]], axis=0)
    n_pad = _round_up(n, _lcm(tm, tk))
    adj_bf16 = _pad2d(graph, n_pad, n_pad).astype(jnp.bfloat16)
    ego_p = _pad2d(ego, n_pad, d).astype(jnp.float32)

    acc = ego_p
    cur = ego_p
    for _ in range(n_layers):
        cur = lightgcn_layer(adj_bf16, cur.astype(jnp.bfloat16), tm=tm, tk=tk)
        acc = acc + cur
    all_emb = acc / jnp.float32(n_layers + 1)                 # (n_pad, D) f32

    # ---- social GAT + (user + social)/2 combine (reads user prefix rows) ----
    u_pad = _round_up(num_users, _lcm(tq, tk_gat))
    all_emb_q = all_emb
    if u_pad > all_emb_q.shape[0]:
        all_emb_q = jnp.pad(all_emb_q, ((0, u_pad - all_emb_q.shape[0]), (0, 0)))
    social_bf16 = _pad2d(social_graph, u_pad, u_pad).astype(jnp.bfloat16)

    user_comb = gat_social_combine(all_emb_q, social_bf16,
                                   params["gat_w"], params["gat_a_src"],
                                   params["gat_a_dst"],
                                   tq=tq, tk=tk_gat, alpha=alpha)

    user_final = user_comb[:num_users]
    item_all = all_emb[num_users:num_users + num_items]
    return user_final, item_all


# --------------------------------------------------------------------------
# Pure-JAX f32 reference for validation
# --------------------------------------------------------------------------
def mbsoc_forward_ref(params, graph, social_graph, num_users,
                      n_layers=N_LAYERS, alpha=LEAKY_ALPHA):
    ego = jnp.concatenate([params["user_emb"], params["item_emb"]], axis=0)
    acc = ego
    cur = ego
    for _ in range(n_layers):
        cur = graph @ cur
        acc = acc + cur
    all_emb = acc / (n_layers + 1)
    user_all, item_all = all_emb[:num_users], all_emb[num_users:]

    x = user_all
    h = x @ params["gat_w"]
    e = (h @ params["gat_a_src"]) + (params["gat_a_dst"] @ h.T)
    e = jnp.where(e > 0, e, alpha * e)
    e = jnp.where(social_graph > 0, e, -1e9)
    e = e - jnp.max(e, axis=-1, keepdims=True)
    p = jnp.exp(e)
    attn = p / jnp.sum(p, axis=-1, keepdims=True)
    social = attn @ h
    social = jnp.where(social > 0, social, jnp.expm1(social))
    return 0.5 * (x + social), item_all


# --------------------------------------------------------------------------
if __name__ == "__main__":
    num_users, num_items, emb_dim = 256, 256, 32
    n = num_users + num_items

    key = jax.random.PRNGKey(0)
    k_ue, k_ie, k_r, k_s, k_w, k_a1, k_a2 = jax.random.split(key, 7)

    params = {
        "user_emb": 0.1 * jax.random.normal(k_ue, (num_users, emb_dim),
                                            jnp.float32),
        "item_emb": 0.1 * jax.random.normal(k_ie, (num_items, emb_dim),
                                            jnp.float32),
        "gat_w": jax.random.normal(k_w, (emb_dim, emb_dim),
                                   jnp.float32) / jnp.sqrt(emb_dim),
        "gat_a_src": jax.random.normal(k_a1, (emb_dim, 1), jnp.float32) * 0.1,
        "gat_a_dst": jax.random.normal(k_a2, (1, emb_dim), jnp.float32) * 0.1,
    }

    # Symmetric-normalized bipartite user-item graph (dense f32; cast to bf16
    # inside the wrapper for the streamed SpMM).
    r = jax.random.bernoulli(k_r, 0.1, (num_users, num_items)).astype(
        jnp.float32)
    adj = jnp.block([[jnp.zeros((num_users, num_users), jnp.float32), r],
                     [r.T, jnp.zeros((num_items, num_items), jnp.float32)]])
    deg = adj.sum(axis=1)
    d_inv_sqrt = jnp.where(deg > 0, 1.0 / jnp.sqrt(deg), 0.0)
    graph = d_inv_sqrt[:, None] * adj * d_inv_sqrt[None, :]

    # Social graph: symmetric 0/1 with self loops.
    s = jax.random.bernoulli(k_s, 0.1, (num_users, num_users)).astype(
        jnp.float32)
    social_graph = jnp.minimum(s + s.T + jnp.eye(num_users, dtype=jnp.float32),
                               1.0)

    user_out, item_out = mbsoc_forward(params, graph, social_graph, num_users)
    jax.block_until_ready((user_out, item_out))

    user_ref, item_ref = mbsoc_forward_ref(params, graph, social_graph,
                                           num_users)
    assert user_out.shape == (num_users, emb_dim)
    assert item_out.shape == (num_items, emb_dim)
    # bf16 adjacency/embedding streaming vs f32 reference -> loosened tolerance.
    assert jnp.allclose(user_out, user_ref, atol=5e-3, rtol=1e-2)
    assert jnp.allclose(item_out, item_ref, atol=5e-3, rtol=1e-2)

    print("KERNEL_OK")
</pallas_src>

<mosaic_0001>
module attributes {stable_mosaic.version = 11 : i64} {
  func.func @_spmm_layer_kernel(%arg0: i32, %arg1: i32, %arg2: memref<256x256xbf16, #tpu.memory_space<vmem>>, %arg3: memref<256x32xbf16, #tpu.memory_space<vmem>>, %arg4: memref<256x32xf32, #tpu.memory_space<vmem>>, %arg5: memref<256x32xf32, #tpu.memory_space<vmem>>) attributes {dimension_semantics = [#tpu.dimension_semantics<parallel>, #tpu.dimension_semantics<arbitrary>], iteration_bounds = array<i64: 2, 2>, scalar_prefetch = 0 : i64, scratch_operands = 1 : i64, tpu.core_type = #tpu.core_type<tc>, window_params = [{transform_indices = @transform_0, window_bounds = array<i64: 256, 256>}, {transform_indices = @transform_1, window_bounds = array<i64: 256, 32>}, {transform_indices = @transform_2, window_bounds = array<i64: 256, 32>}]} {
    %c0_i32 = arith.constant 0 : i32
    %0 = arith.cmpi eq, %arg1, %c0_i32 : i32
    %1 = arith.extui %0 : i1 to i32
    %c0_i32_0 = arith.constant 0 : i32
    %2 = arith.cmpi ne, %1, %c0_i32_0 : i32
    scf.if %2 {
      %cst_9 = arith.constant 0.000000e+00 : f32
      %12 = vector.broadcast %cst_9 : f32 to vector<256x32xf32>
      %c0_10 = arith.constant 0 : index
      %c0_11 = arith.constant 0 : index
      %13 = vector.load %arg5[%c0_10, %c0_11] : memref<256x32xf32, #tpu.memory_space<vmem>>, vector<256x32xf32>
      tpu.vector_store %arg5[%c0_10, %c0_11], %12 {strides = array<i32>} : memref<256x32xf32, #tpu.memory_space<vmem>>, vector<256x32xf32>,
    } else {
    }
    %c0 = arith.constant 0 : index
    %c0_1 = arith.constant 0 : index
    %3 = vector.load %arg5[%c0, %c0_1] : memref<256x32xf32, #tpu.memory_space<vmem>>, vector<256x32xf32>
    %c0_2 = arith.constant 0 : index
    %c0_3 = arith.constant 0 : index
    %4 = vector.load %arg2[%c0_2, %c0_3] : memref<256x256xbf16, #tpu.memory_space<vmem>>, vector<256x256xbf16>
    %c0_4 = arith.constant 0 : index
    %c0_5 = arith.constant 0 : index
    %5 = vector.load %arg3[%c0_4, %c0_5] : memref<256x32xbf16, #tpu.memory_space<vmem>>, vector<256x32xbf16>
    %cst = arith.constant dense<0.000000e+00> : vector<256x32xf32>
    %6 = tpu.matmul %4, %5, %cst {dimension_numbers = #tpu.dot_dimension_numbers<[1], [0], [0], [1], [0, 0, 1, 1], [], []>} : vector<256x256xbf16>, vector<256x32xbf16>, vector<256x32xf32> -> vector<256x32xf32>
    %7 = arith.addf %3, %6 : vector<256x32xf32>
    %c0_6 = arith.constant 0 : index
    %c0_7 = arith.constant 0 : index
    %8 = vector.load %arg5[%c0_6, %c0_7] : memref<256x32xf32, #tpu.memory_space<vmem>>, vector<256x32xf32>
    tpu.vector_store %arg5[%c0_6, %c0_7], %7 {strides = array<i32>} : memref<256x32xf32, #tpu.memory_space<vmem>>, vector<256x32xf32>,
    %c1_i32 = arith.constant 1 : i32
    %9 = arith.cmpi eq, %arg1, %c1_i32 : i32
    %10 = arith.extui %9 : i1 to i32
    %c0_i32_8 = arith.constant 0 : i32
    %11 = arith.cmpi ne, %10, %c0_i32_8 : i32
    scf.if %11 {
      %c0_9 = arith.constant 0 : index
      %c0_10 = arith.constant 0 : index
      %12 = vector.load %arg5[%c0_9, %c0_10] : memref<256x32xf32, #tpu.memory_space<vmem>>, vector<256x32xf32>
      %c0_11 = arith.constant 0 : index
      %c0_12 = arith.constant 0 : index
      %13 = vector.load %arg4[%c0_11, %c0_12] : memref<256x32xf32, #tpu.memory_space<vmem>>, vector<256x32xf32>
      tpu.vector_store %arg4[%c0_11, %c0_12], %12 {strides = array<i32>} : memref<256x32xf32, #tpu.memory_space<vmem>>, vector<256x32xf32>,
    } else {
    }
    return
  }
  func.func @transform_0(%arg0: i32, %arg1: i32) -> (i32, i32) {
    %c0_i32 = arith.constant 0 : i32
    return %arg0, %arg1 : i32, i32
  }
  func.func @transform_1(%arg0: i32, %arg1: i32) -> (i32, i32) {
    %c0_i32 = arith.constant 0 : i32
    %c0_i32_0 = arith.constant 0 : i32
    return %arg1, %c0_i32 : i32, i32
  }
  func.func @transform_2(%arg0: i32, %arg1: i32) -> (i32, i32) {
    %c0_i32 = arith.constant 0 : i32
    %c0_i32_0 = arith.constant 0 : i32
    return %arg0, %c0_i32 : i32, i32
  }
}

</mosaic_0001>

<llo_original>
// kernel: tpu_custom_call.1
$region0: #{tpu_custom_call.1}
  #allocation0 [shape = 'u32[]', space=smem, size = 0x4, offset = 0x4, fixed_abs, tag = 'smem constant byte address 0x4 - core index']
  #allocation1 [shape = 'u32[144,128]{1,0:T(1,128)}', space=vmem, size = 0x12000, scoped, tag = 'internal scratch']
  #allocation2 [shape = 'f32[256,32]{1,0:T(8,128)}', space=vmem, size = 0x20000, scoped, tag = 'scratch operand']
  %s0 = inlined_call_operand.hbm [shape: bf16[512,512], index: 0, kind: input, shape index: {}]
  %s1 = inlined_call_operand.vmem [shape: bf16[512,32], index: 1, kind: input, shape index: {}]
  %s2 = inlined_call_operand.vmem [shape: f32[512,32], index: 2, kind: output, shape index: {}]
  %s3 = sld [smem:[#allocation0]]
  $region53: #{tpu_custom_call.1} parent=0
    _
  %s5 = ssub.s32 1, %s3
  %s6 = scalar_select 0, %s5, %s3
  $region1: #{tpu_custom_call.1} parent=0
    #allocation3 [shape = 'u8[262144]{0}', space=vmem, size = 0x40000, scoped, tag = 'input window, operand 0']
    #allocation4 [shape = 's32[2]{0}', space=sflag, size = 0x8, scoped, tag = 'scoped memory for tpu_custom_call.1']
    %7 = vsyncpa [#allocation4], 0
    %s8 = scalar_lea.sflag [#allocation4], 1
    %9 = vsyncpa %s8, 0
    loop: start=0, step=1, limit=6
    $region2: #{tpu_custom_call.1} parent=1 // loop_pre_header
      _
    $region3: #{tpu_custom_call.1} parent=1 // loop_header
      %s11 = sphi 0, %s15
      %p12 = scmp.ge.s32.totalorder %s11, 6
      %s18 = sphi 0, %s30
      %s19 = sphi 0, %s26
      %s20 = sphi 0, %s18
      %s21 = sphi 0, %s19
      %s22 = sphi 0, %s20
      %s23 = sphi 0, %s21
      %s35 = sphi 0, %s37
      %s38 = sphi 0, %s35
      %s39 = sphi 0, %s38
      %s55 = sphi 0, %s39
      %s61 = sphi 0, %s63
      %s64 = sphi 0, %s61
      %s65 = sphi 0, %s64
      %s81 = sphi 0, %s65
      %s87 = sphi 0, %s89
      %s90 = sphi 0, %s87
      %s91 = sphi 0, %s90
      %s107 = sphi 0, %s91
    $region4: #{tpu_custom_call.1} parent=1 // loop_header_branch
      %14 = sbr.rel (%p12) target = $region8
    $region5: #{tpu_custom_call.1} parent=1 // loop_body
      %s16 = ssub.s32 %s11, 1
      %s17 = ssub.s32 %s11, 2
      %s24 = sadd.s32 1, %s19
      %p25 = scmp.ge.s32.totalorder %s24, 2
      %s26 = scalar_select %p25, 0, %s24
      %s27 = sadd.s32 1, %s18
      %s28 = scalar_select %p25, %s27, %s18
      %p29 = scmp.ge.s32.totalorder %s28, 2
      %s30 = scalar_select %p29, 0, %s28
      %s31 = ssub.s32 %s18, %s30
      %s32 = ssub.s32 %s19, %s26
      %s33 = sor.u32 %s31, %s32
      %p34 = scmp.eq.s32.totalorder %s33, 0
      %s36 = sadd.s32 %s35, 1
      %s37 = scalar_select %p34, %s35, %s36
      %p40 = pneg %p34
      %p41 = scmp.eq.s32.totalorder %s11, 3
      %p42 = por %p40, %p41
      %p43 = scmp.ne.s32.totalorder %s35, %s38
      %p44 = scmp.eq.s32.totalorder %s11, 0
      %p45 = por %p43, %p44
      %p46 = scmp.ne.s32.totalorder %s35, %s38
      %p47 = scmp.eq.s32.totalorder %s16, 3
      %p48 = por %p46, %p47
      %p49 = scmp.ne.s32.totalorder %s38, %s39
      %p50 = scmp.eq.s32.totalorder %s16, 0
      %p51 = por %p49, %p50
      %p52 = scmp.ne.s32.totalorder %s38, %s39
      %p53 = scmp.eq.s32.totalorder %s17, 3
      %p54 = por %p52, %p53
      %p56 = scmp.ne.s32.totalorder %s39, %s55
      %p57 = scmp.eq.s32.totalorder %s17, 0
      %p58 = por %p56, %p57
      %s59 = ssub.s32 %s19, %s26
      %p60 = scmp.eq.s32.totalorder %s59, 0
      %s62 = sadd.s32 %s61, 1
      %s63 = scalar_select %p60, %s61, %s62
      %p66 = pneg %p60
      %p67 = scmp.eq.s32.totalorder %s11, 3
      %p68 = por %p66, %p67
      %p69 = scmp.ne.s32.totalorder %s61, %s64
      %p70 = scmp.eq.s32.totalorder %s11, 0
      %p71 = por %p69, %p70
      %p72 = scmp.ne.s32.totalorder %s61, %s64
      %p73 = scmp.eq.s32.totalorder %s16, 3
      %p74 = por %p72, %p73
      %p75 = scmp.ne.s32.totalorder %s64, %s65
      %p76 = scmp.eq.s32.totalorder %s16, 0
      %p77 = por %p75, %p76
      %p78 = scmp.ne.s32.totalorder %s64, %s65
      %p79 = scmp.eq.s32.totalorder %s17, 3
      %p80 = por %p78, %p79
      %p82 = scmp.ne.s32.totalorder %s65, %s81
      %p83 = scmp.eq.s32.totalorder %s17, 0
      %p84 = por %p82, %p83
      %s85 = ssub.s32 %s18, %s30
      %p86 = scmp.eq.s32.totalorder %s85, 0
      %s88 = sadd.s32 %s87, 1
      %s89 = scalar_select %p86, %s87, %s88
      %p92 = pneg %p86
      %p93 = scmp.eq.s32.totalorder %s11, 3
      %p94 = por %p92, %p93
      %p95 = scmp.ne.s32.totalorder %s87, %s90
      %p96 = scmp.eq.s32.totalorder %s11, 0
      %p97 = por %p95, %p96
      %p98 = scmp.ne.s32.totalorder %s87, %s90
      %p99 = scmp.eq.s32.totalorder %s16, 3
      %p100 = por %p98, %p99
      %p101 = scmp.ne.s32.totalorder %s90, %s91
      %p102 = scmp.eq.s32.totalorder %s16, 0
      %p103 = por %p101, %p102
      %p104 = scmp.ne.s32.totalorder %s90, %s91
      %p105 = scmp.eq.s32.totalorder %s17, 3
      %p106 = por %p104, %p105
      %p108 = scmp.ne.s32.totalorder %s91, %s107
      %p109 = scmp.eq.s32.totalorder %s17, 0
      %p110 = por %p108, %p109
      %p111 = scmp.le.s32.totalorder 1, %s11
      %p112 = scmp.lt.s32.totalorder %s11, 5
      %p113 = pnand %p111, %p112
      %p114 = pneg %p113
      // Predicated region
      $region9: #{tpu_custom_call.1} parent=5 // pred_check
        _
      $region10: #{tpu_custom_call.1} parent=5 // pred_check_branch
        %116 = sbr.rel (%p113) target = $region12
      $region11: #{tpu_custom_call.1} parent=5 // pred_region
        %s117 = ssub.s32 %s11, 1
      $region12: #{tpu_custom_call.1} parent=5 // pred_fallthru
        _
      %p118 = scmp.lt.s32.totalorder %s11, 4
      // Predicated region
      $region13: #{tpu_custom_call.1} parent=5 // pred_check
        %p119 = pneg %p118
      $region14: #{tpu_custom_call.1} parent=5 // pred_check_branch
        %121 = sbr.rel (%p119) target = $region16
      $region15: #{tpu_custom_call.1} parent=5 // pred_region
        // Predicated region
        $region17: #{tpu_custom_call.1} parent=15 // pred_check
          %p122 = pneg %p45
        $region18: #{tpu_custom_call.1} parent=15 // pred_check_branch
          %124 = sbr.rel (%p122) target = $region20
        $region19: #{tpu_custom_call.1} parent=15 // pred_region
          %s125 = sand.u32 %s35, 1
          %s126 = scalar_lea.sflag [#allocation4], %s125
          %s127 = sand.u32 %s35, 1
          %s128 = smul.addr %s127, 256
          %s129 = scalar_lea.vmem [#allocation3], %s128
          %s130 = smul.u32 32, %s18
          %s131 = smul.u32 2, %s19
          %s133 = ssub.s32 4096, 4096
          %134 = vsyncadd %s126, %s133
          %s135 = smul.addr %s130, 4
          %s136 = sadd.s32 %s131, %s135
          %s137 = smul.addr %s136, 64
          %s138 = scalar_lea.hbm %s0, %s137
          %s139 = sshll.u32 %s129, 4
          %s140 = int_to_ptr.vmem [resolvable:$true] %s139
          %145 = dma.hbm_to_vmem [thread:$0]  %s138, 4096, %s140, %s126, 256, 128, 8
        $region20: #{tpu_custom_call.1} parent=15 // pred_fallthru
          _
        // Predicated region
        $region21: #{tpu_custom_call.1} parent=15 // pred_check
          %p146 = pneg %p71
        $region22: #{tpu_custom_call.1} parent=15 // pred_check_branch
          %148 = sbr.rel (%p146) target = $region24
        $region23: #{tpu_custom_call.1} parent=15 // pred_region
          %s149 = smul.u32 32, %s19
          %p150 = scmp.lt.s32.totalorder %s149, 63
          %s151 = scalar_select %p150, %s149, 63
          %s152 = smul.addr %s151, 4
          %s153 = scalar_lea.vmem %s1, %s152
          %s154 = smul.u32 32, %s19
        $region24: #{tpu_custom_call.1} parent=15 // pred_fallthru
          _
      $region16: #{tpu_custom_call.1} parent=5 // pred_fallthru
        _
      %p155 = scmp.le.s32.totalorder 1, %s11
      %p156 = scmp.lt.s32.totalorder %s11, 5
      %p157 = pnand %p155, %p156
      %p158 = pneg %p157
      // Predicated region
      $region25: #{tpu_custom_call.1} parent=5 // pred_check
        _
      $region26: #{tpu_custom_call.1} parent=5 // pred_check_branch
        %160 = sbr.rel (%p157) target = $region28
      $region27: #{tpu_custom_call.1} parent=5 // pred_region
        %s161 = ssub.s32 %s11, 1
        %s162 = sand.u32 %s38, 1
        %s163 = scalar_lea.sflag [#allocation4], %s162
        %s164 = sand.u32 %s38, 1
        %s165 = smul.addr %s164, 256
        %s166 = scalar_lea.vmem [#allocation3], %s165
        // Predicated region
        $region29: #{tpu_custom_call.1} parent=27 // pred_check
          %p167 = pneg %p51
        $region30: #{tpu_custom_call.1} parent=27 // pred_check_branch
          %169 = sbr.rel (%p167) target = $region32
        $region31: #{tpu_custom_call.1} parent=27 // pred_region
          %170 = dma.done %s163, 4096
        $region32: #{tpu_custom_call.1} parent=27 // pred_fallthru
          _
        %s171 = sand.u32 %s38, 1
        %s172 = scalar_lea.sflag [#allocation4], %s171
        %s173 = sand.u32 %s38, 1
        %s174 = smul.addr %s173, 256
        %s175 = scalar_lea.vmem [#allocation3], %s174
        %p176 = pneg %p51
        %p177 = pneg %p48
        %s178 = smul.u32 32, %s21
        %p179 = scmp.lt.s32.totalorder %s178, 63
        %s180 = scalar_select %p179, %s178, 63
        %s181 = smul.addr %s180, 4
        %s182 = scalar_lea.vmem %s1, %s181
        %p183 = pneg %p77
        %p184 = pneg %p74
        %p185 = pneg %p103
        %p186 = pneg %p100
        %s187 = smul.u32 32, %s20
        %p188 = scmp.lt.s32.totalorder %s187, 63
        %s189 = scalar_select %p188, %s187, 63
        %s190 = smul.addr %s189, 8
        %s191 = scalar_lea.vmem %s2, %s190
        %s192 = smul.u32 32, %s20
        %s193 = smul.u32 2, %s21
        %s194 = smul.u32 32, %s21
        %p195 = scmp.lt.s32.totalorder %s194, 63
        %s196 = scalar_select %p195, %s194, 63
        %s197 = smul.addr %s196, 4
        %s198 = scalar_lea.vmem %s1, %s197
        %s199 = smul.u32 32, %s21
        %s200 = smul.u32 32, %s20
        %p201 = scmp.lt.s32.totalorder %s200, 63
        %s202 = scalar_select %p201, %s200, 63
        %s203 = smul.addr %s202, 8
        %s204 = scalar_lea.vmem %s2, %s203
        %s205 = smul.u32 32, %s20
        %p207 = scmp.eq.s32.totalorder %s21, 0
        // Predicated region
        $region33: #{tpu_custom_call.1} parent=27 // pred_check
          %p208 = pneg %p207
        $region34: #{tpu_custom_call.1} parent=27 // pred_check_branch
          %210 = sbr.rel (%p208) target = $region36
        $region35: #{tpu_custom_call.1} parent=27 // pred_region
          %vm211 = vcmask 261120
          %212 = vst.msk [vmem:[#allocation2] sm:$0xff] %vm211, 0.0
          %213 = vst.msk [vmem:[#allocation2 + $0x8] sm:$0xff] %vm211, 0.0
          %214 = vst.msk [vmem:[#allocation2 + $0x10] sm:$0xff] %vm211, 0.0
          %215 = vst.msk [vmem:[#allocation2 + $0x18] sm:$0xff] %vm211, 0.0
          %216 = vst.msk [vmem:[#allocation2 + $0x20] sm:$0xff] %vm211, 0.0
          %217 = vst.msk [vmem:[#allocation2 + $0x28] sm:$0xff] %vm211, 0.0
          %218 = vst.msk [vmem:[#allocation2 + $0x30] sm:$0xff] %vm211, 0.0
          %219 = vst.msk [vmem:[#allocation2 + $0x38] sm:$0xff] %vm211, 0.0
          %220 = vst.msk [vmem:[#allocation2 + $0x40] sm:$0xff] %vm211, 0.0
          %221 = vst.msk [vmem:[#allocation2 + $0x48] sm:$0xff] %vm211, 0.0
          %222 = vst.msk [vmem:[#allocation2 + $0x50] sm:$0xff] %vm211, 0.0
          %223 = vst.msk [vmem:[#allocation2 + $0x58] sm:$0xff] %vm211, 0.0
          %224 = vst.msk [vmem:[#allocation2 + $0x60] sm:$0xff] %vm211, 0.0
          %225 = vst.msk [vmem:[#allocation2 + $0x68] sm:$0xff] %vm211, 0.0
          %226 = vst.msk [vmem:[#allocation2 + $0x70] sm:$0xff] %vm211, 0.0
          %227 = vst.msk [vmem:[#allocation2 + $0x78] sm:$0xff] %vm211, 0.0
          %228 = vst.msk [vmem:[#allocation2 + $0x80] sm:$0xff] %vm211, 0.0
          %229 = vst.msk [vmem:[#allocation2 + $0x88] sm:$0xff] %vm211, 0.0
          %230 = vst.msk [vmem:[#allocation2 + $0x90] sm:$0xff] %vm211, 0.0
          %231 = vst.msk [vmem:[#allocation2 + $0x98] sm:$0xff] %vm211, 0.0
          %232 = vst.msk [vmem:[#allocation2 + $0xa0] sm:$0xff] %vm211, 0.0
          %233 = vst.msk [vmem:[#allocation2 + $0xa8] sm:$0xff] %vm211, 0.0
          %234 = vst.msk [vmem:[#allocation2 + $0xb0] sm:$0xff] %vm211, 0.0
          %235 = vst.msk [vmem:[#allocation2 + $0xb8] sm:$0xff] %vm211, 0.0
          %236 = vst.msk [vmem:[#allocation2 + $0xc0] sm:$0xff] %vm211, 0.0
          %237 = vst.msk [vmem:[#allocation2 + $0xc8] sm:$0xff] %vm211, 0.0
          %238 = vst.msk [vmem:[#allocation2 + $0xd0] sm:$0xff] %vm211, 0.0
          %239 = vst.msk [vmem:[#allocation2 + $0xd8] sm:$0xff] %vm211, 0.0
          %240 = vst.msk [vmem:[#allocation2 + $0xe0] sm:$0xff] %vm211, 0.0
          %241 = vst.msk [vmem:[#allocation2 + $0xe8] sm:$0xff] %vm211, 0.0
          %242 = vst.msk [vmem:[#allocation2 + $0xf0] sm:$0xff] %vm211, 0.0
          %243 = vst.msk [vmem:[#allocation2 + $0xf8] sm:$0xff] %vm211, 0.0
        $region36: #{tpu_custom_call.1} parent=27 // pred_fallthru
          _
        %v244 = vld [vmem:[#allocation2] sm:$0xff]
        %v245 = vld [vmem:[#allocation2 + $0x8] sm:$0xff]
        %v246 = vld [vmem:[#allocation2 + $0x10] sm:$0xff]
        %v247 = vld [vmem:[#allocation2 + $0x18] sm:$0xff]
        %v248 = vld [vmem:[#allocation2 + $0x20] sm:$0xff]
        %v249 = vld [vmem:[#allocation2 + $0x28] sm:$0xff]
        %v250 = vld [vmem:[#allocation2 + $0x30] sm:$0xff]
        %v251 = vld [vmem:[#allocation2 + $0x38] sm:$0xff]
        %v252 = vld [vmem:[#allocation2 + $0x40] sm:$0xff]
        %v253 = vld [vmem:[#allocation2 + $0x48] sm:$0xff]
        %v254 = vld [vmem:[#allocation2 + $0x50] sm:$0xff]
        %v255 = vld [vmem:[#allocation2 + $0x58] sm:$0xff]
        %v256 = vld [vmem:[#allocation2 + $0x60] sm:$0xff]
        %v257 = vld [vmem:[#allocation2 + $0x68] sm:$0xff]
        %v258 = vld [vmem:[#allocation2 + $0x70] sm:$0xff]
        %v259 = vld [vmem:[#allocation2 + $0x78] sm:$0xff]
        %v260 = vld [vmem:[#allocation2 + $0x80] sm:$0xff]
        %v261 = vld [vmem:[#allocation2 + $0x88] sm:$0xff]
        %v262 = vld [vmem:[#allocation2 + $0x90] sm:$0xff]
        %v263 = vld [vmem:[#allocation2 + $0x98] sm:$0xff]
        %v264 = vld [vmem:[#allocation2 + $0xa0] sm:$0xff]
        %v265 = vld [vmem:[#allocation2 + $0xa8] sm:$0xff]
        %v266 = vld [vmem:[#allocation2 + $0xb0] sm:$0xff]
        %v267 = vld [vmem:[#allocation2 + $0xb8] sm:$0xff]
        %v268 = vld [vmem:[#allocation2 + $0xc0] sm:$0xff]
        %v269 = vld [vmem:[#allocation2 + $0xc8] sm:$0xff]
        %v270 = vld [vmem:[#allocation2 + $0xd0] sm:$0xff]
        %v271 = vld [vmem:[#allocation2 + $0xd8] sm:$0xff]
        %v272 = vld [vmem:[#allocation2 + $0xe0] sm:$0xff]
        %v273 = vld [vmem:[#allocation2 + $0xe8] sm:$0xff]
        %v274 = vld [vmem:[#allocation2 + $0xf0] sm:$0xff]
        %v275 = vld [vmem:[#allocation2 + $0xf8] sm:$0xff]
        %v276 = vld [vmem:[%s166] sm:$0xff]
        %v277 = vld [vmem:[%s166 + $0x8] sm:$0xff]
        %v278 = vld [vmem:[%s166 + $0x10] sm:$0xff]
        %v279 = vld [vmem:[%s166 + $0x18] sm:$0xff]
        %v280 = vld [vmem:[%s166 + $0x20] sm:$0xff]
        %v281 = vld [vmem:[%s166 + $0x28] sm:$0xff]
        %v282 = vld [vmem:[%s166 + $0x30] sm:$0xff]
        %v283 = vld [vmem:[%s166 + $0x38] sm:$0xff]
        %v284 = vld [vmem:[%s166 + $0x40] sm:$0xff]
        %v285 = vld [vmem:[%s166 + $0x48] sm:$0xff]
        %v286 = vld [vmem:[%s166 + $0x50] sm:$0xff]
        %v287 = vld [vmem:[%s166 + $0x58] sm:$0xff]
        %v288 = vld [vmem:[%s166 + $0x60] sm:$0xff]
        %v289 = vld [vmem:[%s166 + $0x68] sm:$0xff]
        %v290 = vld [vmem:[%s166 + $0x70] sm:$0xff]
        %v291 = vld [vmem:[%s166 + $0x78] sm:$0xff]
        %v292 = vld [vmem:[%s166 + $0x80] sm:$0xff]
        %v293 = vld [vmem:[%s166 + $0x88] sm:$0xff]
        %v294 = vld [vmem:[%s166 + $0x90] sm:$0xff]
        %v295 = vld [vmem:[%s166 + $0x98] sm:$0xff]
        %v296 = vld [vmem:[%s166 + $0xa0] sm:$0xff]
        %v297 = vld [vmem:[%s166 + $0xa8] sm:$0xff]
        %v298 = vld [vmem:[%s166 + $0xb0] sm:$0xff]
        %v299 = vld [vmem:[%s166 + $0xb8] sm:$0xff]
        %v300 = vld [vmem:[%s166 + $0xc0] sm:$0xff]
        %v301 = vld [vmem:[%s166 + $0xc8] sm:$0xff]
        %v302 = vld [vmem:[%s166 + $0xd0] sm:$0xff]
        %v303 = vld [vmem:[%s166 + $0xd8] sm:$0xff]
        %v304 = vld [vmem:[%s166 + $0xe0] sm:$0xff]
        %v305 = vld [vmem:[%s166 + $0xe8] sm:$0xff]
        %v306 = vld [vmem:[%s166 + $0xf0] sm:$0xff]
        %v307 = vld [vmem:[%s166 + $0xf8] sm:$0xff]
        %v308 = vld [vmem:[%s198] sm:$0xf]
        %v309 = vld [vmem:[%s198 + $0x4] sm:$0xf]
        %v310 = vld [vmem:[%s198 + $0x8] sm:$0xf]
        %v311 = vld [vmem:[%s198 + $0xc] sm:$0xf]
        %v312 = vld [vmem:[%s198 + $0x10] sm:$0xf]
        %v313 = vld [vmem:[%s198 + $0x14] sm:$0xf]
        %v314 = vld [vmem:[%s198 + $0x18] sm:$0xf]
        %v315 = vld [vmem:[%s198 + $0x1c] sm:$0xf]
        %v316 = vld [vmem:[%s198 + $0x20] sm:$0xf]
        %v317 = vld [vmem:[%s198 + $0x24] sm:$0xf]
        %v318 = vld [vmem:[%s198 + $0x28] sm:$0xf]
        %v319 = vld [vmem:[%s198 + $0x2c] sm:$0xf]
        %v320 = vld [vmem:[%s198 + $0x30] sm:$0xf]
        %v321 = vld [vmem:[%s198 + $0x34] sm:$0xf]
        %v322 = vld [vmem:[%s198 + $0x38] sm:$0xf]
        %v323 = vld [vmem:[%s198 + $0x3c] sm:$0xf]
        %v324 = vld [vmem:[%s198 + $0x40] sm:$0xf]
        %v325 = vld [vmem:[%s198 + $0x44] sm:$0xf]
        %v326 = vld [vmem:[%s198 + $0x48] sm:$0xf]
        %v327 = vld [vmem:[%s198 + $0x4c] sm:$0xf]
        %v328 = vld [vmem:[%s198 + $0x50] sm:$0xf]
        %v329 = vld [vmem:[%s198 + $0x54] sm:$0xf]
        %v330 = vld [vmem:[%s198 + $0x58] sm:$0xf]
        %v331 = vld [vmem:[%s198 + $0x5c] sm:$0xf]
        %v332 = vld [vmem:[%s198 + $0x60] sm:$0xf]
        %v333 = vld [vmem:[%s198 + $0x64] sm:$0xf]
        %v334 = vld [vmem:[%s198 + $0x68] sm:$0xf]
        %v335 = vld [vmem:[%s198 + $0x6c] sm:$0xf]
        %v336 = vld [vmem:[%s198 + $0x70] sm:$0xf]
        %v337 = vld [vmem:[%s198 + $0x74] sm:$0xf]
        %v338 = vld [vmem:[%s198 + $0x78] sm:$0xf]
        %v339 = vld [vmem:[%s198 + $0x7c] sm:$0xf]
        %v372 = vunpack.c.l.b16 %v276
        %v373 = vunpack.c.h.b16 %v276
        %v374 = vunpack.c.l.b16 %v277
        %v375 = vunpack.c.h.b16 %v277
        %v376 = vunpack.c.l.b16 %v278
        %v377 = vunpack.c.h.b16 %v278
        %v378 = vunpack.c.l.b16 %v279
        %v379 = vunpack.c.h.b16 %v279
        %v380 = vunpack.c.l.b16 %v280
        %v381 = vunpack.c.h.b16 %v280
        %v382 = vunpack.c.l.b16 %v281
        %v383 = vunpack.c.h.b16 %v281
        %v384 = vunpack.c.l.b16 %v282
        %v385 = vunpack.c.h.b16 %v282
        %v386 = vunpack.c.l.b16 %v283
        %v387 = vunpack.c.h.b16 %v283
        %v388 = vunpack.c.l.b16 %v284
        %v389 = vunpack.c.h.b16 %v284
        %v390 = vunpack.c.l.b16 %v285
        %v391 = vunpack.c.h.b16 %v285
        %v392 = vunpack.c.l.b16 %v286
        %v393 = vunpack.c.h.b16 %v286
        %v394 = vunpack.c.l.b16 %v287
        %v395 = vunpack.c.h.b16 %v287
        %v396 = vunpack.c.l.b16 %v288
        %v397 = vunpack.c.h.b16 %v288
        %v398 = vunpack.c.l.b16 %v289
        %v399 = vunpack.c.h.b16 %v289
        %v400 = vunpack.c.l.b16 %v290
        %v401 = vunpack.c.h.b16 %v290
        %v402 = vunpack.c.l.b16 %v291
        %v403 = vunpack.c.h.b16 %v291
        %v404 = vunpack.c.l.b16 %v292
        %v405 = vunpack.c.h.b16 %v292
        %v406 = vunpack.c.l.b16 %v293
        %v407 = vunpack.c.h.b16 %v293
        %v408 = vunpack.c.l.b16 %v294
        %v409 = vunpack.c.h.b16 %v294
        %v410 = vunpack.c.l.b16 %v295
        %v411 = vunpack.c.h.b16 %v295
        %v412 = vunpack.c.l.b16 %v296
        %v413 = vunpack.c.h.b16 %v296
        %v414 = vunpack.c.l.b16 %v297
        %v415 = vunpack.c.h.b16 %v297
        %v416 = vunpack.c.l.b16 %v298
        %v417 = vunpack.c.h.b16 %v298
        %v418 = vunpack.c.l.b16 %v299
        %v419 = vunpack.c.h.b16 %v299
        %v420 = vunpack.c.l.b16 %v300
        %v421 = vunpack.c.h.b16 %v300
        %v422 = vunpack.c.l.b16 %v301
        %v423 = vunpack.c.h.b16 %v301
        %v424 = vunpack.c.l.b16 %v302
        %v425 = vunpack.c.h.b16 %v302
        %v426 = vunpack.c.l.b16 %v303
        %v427 = vunpack.c.h.b16 %v303
        %v428 = vunpack.c.l.b16 %v304
        %v429 = vunpack.c.h.b16 %v304
        %v430 = vunpack.c.l.b16 %v305
        %v431 = vunpack.c.h.b16 %v305
        %v432 = vunpack.c.l.b16 %v306
        %v433 = vunpack.c.h.b16 %v306
        %v434 = vunpack.c.l.b16 %v307
        %v435 = vunpack.c.h.b16 %v307
        %v436 = vpack.c.b16 %v374, %v372
        %v437 = vpack.c.b16 %v375, %v373
        %v438 = vpack.c.b16 %v378, %v376
        %v439 = vpack.c.b16 %v379, %v377
        %v440 = vpack.c.b16 %v382, %v380
        %v441 = vpack.c.b16 %v383, %v381
        %v442 = vpack.c.b16 %v386, %v384
        %v443 = vpack.c.b16 %v387, %v385
        %v444 = vpack.c.b16 %v390, %v388
        %v445 = vpack.c.b16 %v391, %v389
        %v446 = vpack.c.b16 %v394, %v392
        %v447 = vpack.c.b16 %v395, %v393
        %v448 = vpack.c.b16 %v398, %v396
        %v449 = vpack.c.b16 %v399, %v397
        %v450 = vpack.c.b16 %v402, %v400
        %v451 = vpack.c.b16 %v403, %v401
        %v452 = vpack.c.b16 %v406, %v404
        %v453 = vpack.c.b16 %v407, %v405
        %v454 = vpack.c.b16 %v410, %v408
        %v455 = vpack.c.b16 %v411, %v409
        %v456 = vpack.c.b16 %v414, %v412
        %v457 = vpack.c.b16 %v415, %v413
        %v458 = vpack.c.b16 %v418, %v416
        %v459 = vpack.c.b16 %v419, %v417
        %v460 = vpack.c.b16 %v422, %v420
        %v461 = vpack.c.b16 %v423, %v421
        %v462 = vpack.c.b16 %v426, %v424
        %v463 = vpack.c.b16 %v427, %v425
        %v464 = vpack.c.b16 %v430, %v428
        %v465 = vpack.c.b16 %v431, %v429
        %v466 = vpack.c.b16 %v434, %v432
        %v467 = vpack.c.b16 %v435, %v433
        %v532 = vunpack.c.l.b16 %v308
        %v533 = vunpack.c.l.b16 %v309
        %v534 = vunpack.c.l.b16 %v310
        %v535 = vunpack.c.l.b16 %v311
        %v536 = vunpack.c.l.b16 %v312
        %v537 = vunpack.c.l.b16 %v313
        %v538 = vunpack.c.l.b16 %v314
        %v539 = vunpack.c.l.b16 %v315
        %v540 = vunpack.c.l.b16 %v316
        %v541 = vunpack.c.l.b16 %v317
        %v542 = vunpack.c.l.b16 %v318
        %v543 = vunpack.c.l.b16 %v319
        %v544 = vunpack.c.l.b16 %v320
        %v545 = vunpack.c.l.b16 %v321
        %v546 = vunpack.c.l.b16 %v322
        %v547 = vunpack.c.l.b16 %v323
        %v548 = vunpack.c.l.b16 %v324
        %v549 = vunpack.c.l.b16 %v325
        %v550 = vunpack.c.l.b16 %v326
        %v551 = vunpack.c.l.b16 %v327
        %v552 = vunpack.c.l.b16 %v328
        %v553 = vunpack.c.l.b16 %v329
        %v554 = vunpack.c.l.b16 %v330
        %v555 = vunpack.c.l.b16 %v331
        %v556 = vunpack.c.l.b16 %v332
        %v557 = vunpack.c.l.b16 %v333
        %v558 = vunpack.c.l.b16 %v334
        %v559 = vunpack.c.l.b16 %v335
        %v560 = vunpack.c.l.b16 %v336
        %v561 = vunpack.c.l.b16 %v337
        %v562 = vunpack.c.l.b16 %v338
        %v563 = vunpack.c.l.b16 %v339
        %v564 = vpack.c.b16 %v533, %v532
        %v565 = vpack.c.b16 %v535, %v534
        %v566 = vpack.c.b16 %v537, %v536
        %v567 = vpack.c.b16 %v539, %v538
        %v568 = vpack.c.b16 %v541, %v540
        %v569 = vpack.c.b16 %v543, %v542
        %v570 = vpack.c.b16 %v545, %v544
        %v571 = vpack.c.b16 %v547, %v546
        %v572 = vpack.c.b16 %v549, %v548
        %v573 = vpack.c.b16 %v551, %v550
        %v574 = vpack.c.b16 %v553, %v552
        %v575 = vpack.c.b16 %v555, %v554
        %v576 = vpack.c.b16 %v557, %v556
        %v577 = vpack.c.b16 %v559, %v558
        %v578 = vpack.c.b16 %v561, %v560
        %v579 = vpack.c.b16 %v563, %v562
        %596 = vmatprep.subr.bf16.mxu0 0
        %597 = vmatpush1.bf16.msra.mxu0 %v564
        %598 = vmatprep.subr.bf16.mxu0 0
        %599 = vmatpush1.bf16.msra.mxu0 %v565
        %600 = vmatprep.subr.bf16.mxu0 0
        %601 = vmatpush1.bf16.msra.mxu0 %v566
        %602 = vmatprep.subr.bf16.mxu0 0
        %603 = vmatpush1.bf16.msra.mxu0 %v567
        %604 = vmatprep.subr.bf16.mxu0 0
        %605 = vmatpush1.bf16.msra.mxu0 %v568
        %606 = vmatprep.subr.bf16.mxu0 0
        %607 = vmatpush1.bf16.msra.mxu0 %v569
        %608 = vmatprep.subr.bf16.mxu0 0
        %609 = vmatpush1.bf16.msra.mxu0 %v570
        %610 = vmatprep.subr.bf16.mxu0 0
        %611 = vmatpush1.bf16.msra.mxu0 %v571
        %612 = vmatprep.subr.bf16.mxu0 0
        %613 = vmatpush1.bf16.msra.mxu0 %v572
        %614 = vmatprep.subr.bf16.mxu0 0
        %615 = vmatpush1.bf16.msra.mxu0 %v573
        %616 = vmatprep.subr.bf16.mxu0 0
        %617 = vmatpush1.bf16.msra.mxu0 %v574
        %618 = vmatprep.subr.bf16.mxu0 0
        %619 = vmatpush1.bf16.msra.mxu0 %v575
        %620 = vmatprep.subr.bf16.mxu0 0
        %621 = vmatpush1.bf16.msra.mxu0 %v576
        %622 = vmatprep.subr.bf16.mxu0 0
        %623 = vmatpush1.bf16.msra.mxu0 %v577
        %624 = vmatprep.subr.bf16.mxu0 0
        %625 = vmatpush1.bf16.msra.mxu0 %v578
        %626 = vmatprep.subr.bf16.mxu0 0
        %627 = vmatpush1.bf16.msra.mxu0 %v579
        %628 = vmatprep.mubr.bf16.mxu0 %v437
        %629 = vmatmul.mubr.bf16.gmra.mrb[0].mxu0 %v436
        %v630 = vpop.f32.mrb[0].mxu0
        %v631 = vadd.f32 0.0, %v630
        %v632 = vpop.f32.mrb[0].mxu0
        %v633 = vpop.f32.mrb[0].mxu0
        %v634 = vadd.f32 0.0, %v633
        %v635 = vpop.f32.mrb[0].mxu0
        %636 = vmatprep.mubr.bf16.mxu0 %v439
        %637 = vmatmul.mubr.bf16.gmra.mrb[0].mxu0 %v438
        %v638 = vpop.f32.mrb[0].mxu0
        %v639 = vadd.f32 0.0, %v638
        %v640 = vpop.f32.mrb[0].mxu0
        %v641 = vpop.f32.mrb[0].mxu0
        %v642 = vadd.f32 0.0, %v641
        %v643 = vpop.f32.mrb[0].mxu0
        %644 = vmatprep.mubr.bf16.mxu0 %v441
        %645 = vmatmul.mubr.bf16.gmra.mrb[0].mxu0 %v440
        %v646 = vpop.f32.mrb[0].mxu0
        %v647 = vadd.f32 0.0, %v646
        %v648 = vpop.f32.mrb[0].mxu0
        %v649 = vpop.f32.mrb[0].mxu0
        %v650 = vadd.f32 0.0, %v649
        %v651 = vpop.f32.mrb[0].mxu0
        %652 = vmatprep.mubr.bf16.mxu0 %v443
        %653 = vmatmul.mubr.bf16.gmra.mrb[0].mxu0 %v442
        %v654 = vpop.f32.mrb[0].mxu0
        %v655 = vadd.f32 0.0, %v654
        %v656 = vpop.f32.mrb[0].mxu0
        %v657 = vpop.f32.mrb[0].mxu0
        %v658 = vadd.f32 0.0, %v657
        %v659 = vpop.f32.mrb[0].mxu0
        %660 = vmatprep.mubr.bf16.mxu0 %v445
        %661 = vmatmul.mubr.bf16.gmra.mrb[0].mxu0 %v444
        %v662 = vpop.f32.mrb[0].mxu0
        %v663 = vadd.f32 0.0, %v662
        %v664 = vpop.f32.mrb[0].mxu0
        %v665 = vpop.f32.mrb[0].mxu0
        %v666 = vadd.f32 0.0, %v665
        %v667 = vpop.f32.mrb[0].mxu0
        %668 = vmatprep.mubr.bf16.mxu0 %v447
        %669 = vmatmul.mubr.bf16.gmra.mrb[0].mxu0 %v446
        %v670 = vpop.f32.mrb[0].mxu0
        %v671 = vadd.f32 0.0, %v670
        %v672 = vpop.f32.mrb[0].mxu0
        %v673 = vpop.f32.mrb[0].mxu0
        %v674 = vadd.f32 0.0, %v673
        %v675 = vpop.f32.mrb[0].mxu0
        %676 = vmatprep.mubr.bf16.mxu0 %v449
        %677 = vmatmul.mubr.bf16.gmra.mrb[0].mxu0 %v448
        %v678 = vpop.f32.mrb[0].mxu0
        %v679 = vadd.f32 0.0, %v678
        %v680 = vpop.f32.mrb[0].mxu0
        %v681 = vpop.f32.mrb[0].mxu0
        %v682 = vadd.f32 0.0, %v681
        %v683 = vpop.f32.mrb[0].mxu0
        %684 = vmatprep.mubr.bf16.mxu0 %v451
        %685 = vmatmul.mubr.bf16.gmra.mrb[0].mxu0 %v450
        %v686 = vpop.f32.mrb[0].mxu0
        %v687 = vadd.f32 0.0, %v686
        %v688 = vpop.f32.mrb[0].mxu0
        %v689 = vpop.f32.mrb[0].mxu0
        %v690 = vadd.f32 0.0, %v689
        %v691 = vpop.f32.mrb[0].mxu0
        %692 = vmatprep.mubr.bf16.mxu0 %v453
        %693 = vmatmul.mubr.bf16.gmra.mrb[0].mxu0 %v452
        %v694 = vpop.f32.mrb[0].mxu0
        %v695 = vadd.f32 0.0, %v694
        %v696 = vpop.f32.mrb[0].mxu0
        %v697 = vpop.f32.mrb[0].mxu0
        %v698 = vadd.f32 0.0, %v697
        %v699 = vpop.f32.mrb[0].mxu0
        %700 = vmatprep.mubr.bf16.mxu0 %v455
        %701 = vmatmul.mubr.bf16.gmra.mrb[0].mxu0 %v454
        %v702 = vpop.f32.mrb[0].mxu0
        %v703 = vadd.f32 0.0, %v702
        %v704 = vpop.f32.mrb[0].mxu0
        %v705 = vpop.f32.mrb[0].mxu0
        %v706 = vadd.f32 0.0, %v705
        %v707 = vpop.f32.mrb[0].mxu0
        %708 = vmatprep.mubr.bf16.mxu0 %v457
        %709 = vmatmul.mubr.bf16.gmra.mrb[0].mxu0 %v456
        %v710 = vpop.f32.mrb[0].mxu0
        %v711 = vadd.f32 0.0, %v710
        %v712 = vpop.f32.mrb[0].mxu0
        %v713 = vpop.f32.mrb[0].mxu0
        %v714 = vadd.f32 0.0, %v713
        %v715 = vpop.f32.mrb[0].mxu0
        %716 = vmatprep.mubr.bf16.mxu0 %v459
        %717 = vmatmul.mubr.bf16.gmra.mrb[0].mxu0 %v458
        %v718 = vpop.f32.mrb[0].mxu0
        %v719 = vadd.f32 0.0, %v718
        %v720 = vpop.f32.mrb[0].mxu0
        %v721 = vpop.f32.mrb[0].mxu0
        %v722 = vadd.f32 0.0, %v721
        %v723 = vpop.f32.mrb[0].mxu0
        %724 = vmatprep.mubr.bf16.mxu0 %v461
        %725 = vmatmul.mubr.bf16.gmra.mrb[0].mxu0 %v460
        %v726 = vpop.f32.mrb[0].mxu0
        %v727 = vadd.f32 0.0, %v726
        %v728 = vpop.f32.mrb[0].mxu0
        %v729 = vpop.f32.mrb[0].mxu0
        %v730 = vadd.f32 0.0, %v729
        %v731 = vpop.f32.mrb[0].mxu0
        %732 = vmatprep.mubr.bf16.mxu0 %v463
        %733 = vmatmul.mubr.bf16.gmra.mrb[0].mxu0 %v462
        %v734 = vpop.f32.mrb[0].mxu0
        %v735 = vadd.f32 0.0, %v734
        %v736 = vpop.f32.mrb[0].mxu0
        %v737 = vpop.f32.mrb[0].mxu0
        %v738 = vadd.f32 0.0, %v737
        %v739 = vpop.f32.mrb[0].mxu0
        %740 = vmatprep.mubr.bf16.mxu0 %v465
        %741 = vmatmul.mubr.bf16.gmra.mrb[0].mxu0 %v464
        %v742 = vpop.f32.mrb[0].mxu0
        %v743 = vadd.f32 0.0, %v742
        %v744 = vpop.f32.mrb[0].mxu0
        %v745 = vpop.f32.mrb[0].mxu0
        %v746 = vadd.f32 0.0, %v745
        %v747 = vpop.f32.mrb[0].mxu0
        %748 = vmatprep.mubr.bf16.mxu0 %v467
        %749 = vmatmul.mubr.bf16.gmra.mrb[0].mxu0 %v466
        %v750 = vpop.f32.mrb[0].mxu0
        %v751 = vadd.f32 0.0, %v750
        %v752 = vpop.f32.mrb[0].mxu0
        %v753 = vpop.f32.mrb[0].mxu0
        %v754 = vadd.f32 0.0, %v753
        %v755 = vpop.f32.mrb[0].mxu0
        %756 = vdwg.mxu0
        %v757 = vadd.f32 %v244, %v631
        %v758 = vadd.f32 %v245, %v634
        %v759 = vadd.f32 %v246, %v639
        %v760 = vadd.f32 %v247, %v642
        %v761 = vadd.f32 %v248, %v647
        %v762 = vadd.f32 %v249, %v650
        %v763 = vadd.f32 %v250, %v655
        %v764 = vadd.f32 %v251, %v658
        %v765 = vadd.f32 %v252, %v663
        %v766 = vadd.f32 %v253, %v666
        %v767 = vadd.f32 %v254, %v671
        %v768 = vadd.f32 %v255, %v674
        %v769 = vadd.f32 %v256, %v679
        %v770 = vadd.f32 %v257, %v682
        %v771 = vadd.f32 %v258, %v687
        %v772 = vadd.f32 %v259, %v690
        %v773 = vadd.f32 %v260, %v695
        %v774 = vadd.f32 %v261, %v698
        %v775 = vadd.f32 %v262, %v703
        %v776 = vadd.f32 %v263, %v706
        %v777 = vadd.f32 %v264, %v711
        %v778 = vadd.f32 %v265, %v714
        %v779 = vadd.f32 %v266, %v719
        %v780 = vadd.f32 %v267, %v722
        %v781 = vadd.f32 %v268, %v727
        %v782 = vadd.f32 %v269, %v730
        %v783 = vadd.f32 %v270, %v735
        %v784 = vadd.f32 %v271, %v738
        %v785 = vadd.f32 %v272, %v743
        %v786 = vadd.f32 %v273, %v746
        %v787 = vadd.f32 %v274, %v751
        %v788 = vadd.f32 %v275, %v754
        %vm789 = vcmask 261120
        %790 = vst.msk [vmem:[#allocation2] sm:$0xff] %vm789, %v757
        %791 = vst.msk [vmem:[#allocation2 + $0x8] sm:$0xff] %vm789, %v758
        %792 = vst.msk [vmem:[#allocation2 + $0x10] sm:$0xff] %vm789, %v759
        %793 = vst.msk [vmem:[#allocation2 + $0x18] sm:$0xff] %vm789, %v760
        %794 = vst.msk [vmem:[#allocation2 + $0x20] sm:$0xff] %vm789, %v761
        %795 = vst.msk [vmem:[#allocation2 + $0x28] sm:$0xff] %vm789, %v762
        %796 = vst.msk [vmem:[#allocation2 + $0x30] sm:$0xff] %vm789, %v763
        %797 = vst.msk [vmem:[#allocation2 + $0x38] sm:$0xff] %vm789, %v764
        %798 = vst.msk [vmem:[#allocation2 + $0x40] sm:$0xff] %vm789, %v765
        %799 = vst.msk [vmem:[#allocation2 + $0x48] sm:$0xff] %vm789, %v766
        %800 = vst.msk [vmem:[#allocation2 + $0x50] sm:$0xff] %vm789, %v767
        %801 = vst.msk [vmem:[#allocation2 + $0x58] sm:$0xff] %vm789, %v768
        %802 = vst.msk [vmem:[#allocation2 + $0x60] sm:$0xff] %vm789, %v769
        %803 = vst.msk [vmem:[#allocation2 + $0x68] sm:$0xff] %vm789, %v770
        %804 = vst.msk [vmem:[#allocation2 + $0x70] sm:$0xff] %vm789, %v771
        %805 = vst.msk [vmem:[#allocation2 + $0x78] sm:$0xff] %vm789, %v772
        %806 = vst.msk [vmem:[#allocation2 + $0x80] sm:$0xff] %vm789, %v773
        %807 = vst.msk [vmem:[#allocation2 + $0x88] sm:$0xff] %vm789, %v774
        %808 = vst.msk [vmem:[#allocation2 + $0x90] sm:$0xff] %vm789, %v775
        %809 = vst.msk [vmem:[#allocation2 + $0x98] sm:$0xff] %vm789, %v776
        %810 = vst.msk [vmem:[#allocation2 + $0xa0] sm:$0xff] %vm789, %v777
        %811 = vst.msk [vmem:[#allocation2 + $0xa8] sm:$0xff] %vm789, %v778
        %812 = vst.msk [vmem:[#allocation2 + $0xb0] sm:$0xff] %vm789, %v779
        %813 = vst.msk [vmem:[#allocation2 + $0xb8] sm:$0xff] %vm789, %v780
        %814 = vst.msk [vmem:[#allocation2 + $0xc0] sm:$0xff] %vm789, %v781
        %815 = vst.msk [vmem:[#allocation2 + $0xc8] sm:$0xff] %vm789, %v782
        %816 = vst.msk [vmem:[#allocation2 + $0xd0] sm:$0xff] %vm789, %v783
        %817 = vst.msk [vmem:[#allocation2 + $0xd8] sm:$0xff] %vm789, %v784
        %818 = vst.msk [vmem:[#allocation2 + $0xe0] sm:$0xff] %vm789, %v785
        %819 = vst.msk [vmem:[#allocation2 + $0xe8] sm:$0xff] %vm789, %v786
        %820 = vst.msk [vmem:[#allocation2 + $0xf0] sm:$0xff] %vm789, %v787
        %821 = vst.msk [vmem:[#allocation2 + $0xf8] sm:$0xff] %vm789, %v788
        %p822 = scmp.eq.s32.totalorder %s21, 1
        // Predicated region
        $region37: #{tpu_custom_call.1} parent=27 // pred_check
          %p823 = pneg %p822
        $region38: #{tpu_custom_call.1} parent=27 // pred_check_branch
          %825 = sbr.rel (%p823) target = $region40
        $region39: #{tpu_custom_call.1} parent=27 // pred_region
          %v826 = vld [vmem:[#allocation2] sm:$0xff]
          %v827 = vld [vmem:[#allocation2 + $0x8] sm:$0xff]
          %v828 = vld [vmem:[#allocation2 + $0x10] sm:$0xff]
          %v829 = vld [vmem:[#allocation2 + $0x18] sm:$0xff]
          %v830 = vld [vmem:[#allocation2 + $0x20] sm:$0xff]
          %v831 = vld [vmem:[#allocation2 + $0x28] sm:$0xff]
          %v832 = vld [vmem:[#allocation2 + $0x30] sm:$0xff]
          %v833 = vld [vmem:[#allocation2 + $0x38] sm:$0xff]
          %v834 = vld [vmem:[#allocation2 + $0x40] sm:$0xff]
          %v835 = vld [vmem:[#allocation2 + $0x48] sm:$0xff]
          %v836 = vld [vmem:[#allocation2 + $0x50] sm:$0xff]
          %v837 = vld [vmem:[#allocation2 + $0x58] sm:$0xff]
          %v838 = vld [vmem:[#allocation2 + $0x60] sm:$0xff]
          %v839 = vld [vmem:[#allocation2 + $0x68] sm:$0xff]
          %v840 = vld [vmem:[#allocation2 + $0x70] sm:$0xff]
          %v841 = vld [vmem:[#allocation2 + $0x78] sm:$0xff]
          %v842 = vld [vmem:[#allocation2 + $0x80] sm:$0xff]
          %v843 = vld [vmem:[#allocation2 + $0x88] sm:$0xff]
          %v844 = vld [vmem:[#allocation2 + $0x90] sm:$0xff]
          %v845 = vld [vmem:[#allocation2 + $0x98] sm:$0xff]
          %v846 = vld [vmem:[#allocation2 + $0xa0] sm:$0xff]
          %v847 = vld [vmem:[#allocation2 + $0xa8] sm:$0xff]
          %v848 = vld [vmem:[#allocation2 + $0xb0] sm:$0xff]
          %v849 = vld [vmem:[#allocation2 + $0xb8] sm:$0xff]
          %v850 = vld [vmem:[#allocation2 + $0xc0] sm:$0xff]
          %v851 = vld [vmem:[#allocation2 + $0xc8] sm:$0xff]
          %v852 = vld [vmem:[#allocation2 + $0xd0] sm:$0xff]
          %v853 = vld [vmem:[#allocation2 + $0xd8] sm:$0xff]
          %v854 = vld [vmem:[#allocation2 + $0xe0] sm:$0xff]
          %v855 = vld [vmem:[#allocation2 + $0xe8] sm:$0xff]
          %v856 = vld [vmem:[#allocation2 + $0xf0] sm:$0xff]
          %v857 = vld [vmem:[#allocation2 + $0xf8] sm:$0xff]
          %858 = vst.msk [vmem:[%s204] sm:$0xff] %vm789, %v826
          %859 = vst.msk [vmem:[%s204 + $0x8] sm:$0xff] %vm789, %v827
          %860 = vst.msk [vmem:[%s204 + $0x10] sm:$0xff] %vm789, %v828
          %861 = vst.msk [vmem:[%s204 + $0x18] sm:$0xff] %vm789, %v829
          %862 = vst.msk [vmem:[%s204 + $0x20] sm:$0xff] %vm789, %v830
          %863 = vst.msk [vmem:[%s204 + $0x28] sm:$0xff] %vm789, %v831
          %864 = vst.msk [vmem:[%s204 + $0x30] sm:$0xff] %vm789, %v832
          %865 = vst.msk [vmem:[%s204 + $0x38] sm:$0xff] %vm789, %v833
          %866 = vst.msk [vmem:[%s204 + $0x40] sm:$0xff] %vm789, %v834
          %867 = vst.msk [vmem:[%s204 + $0x48] sm:$0xff] %vm789, %v835
          %868 = vst.msk [vmem:[%s204 + $0x50] sm:$0xff] %vm789, %v836
          %869 = vst.msk [vmem:[%s204 + $0x58] sm:$0xff] %vm789, %v837
          %870 = vst.msk [vmem:[%s204 + $0x60] sm:$0xff] %vm789, %v838
          %871 = vst.msk [vmem:[%s204 + $0x68] sm:$0xff] %vm789, %v839
          %872 = vst.msk [vmem:[%s204 + $0x70] sm:$0xff] %vm789, %v840
          %873 = vst.msk [vmem:[%s204 + $0x78] sm:$0xff] %vm789, %v841
          %874 = vst.msk [vmem:[%s204 + $0x80] sm:$0xff] %vm789, %v842
          %875 = vst.msk [vmem:[%s204 + $0x88] sm:$0xff] %vm789, %v843
          %876 = vst.msk [vmem:[%s204 + $0x90] sm:$0xff] %vm789, %v844
          %877 = vst.msk [vmem:[%s204 + $0x98] sm:$0xff] %vm789, %v845
          %878 = vst.msk [vmem:[%s204 + $0xa0] sm:$0xff] %vm789, %v846
          %879 = vst.msk [vmem:[%s204 + $0xa8] sm:$0xff] %vm789, %v847
          %880 = vst.msk [vmem:[%s204 + $0xb0] sm:$0xff] %vm789, %v848
          %881 = vst.msk [vmem:[%s204 + $0xb8] sm:$0xff] %vm789, %v849
          %882 = vst.msk [vmem:[%s204 + $0xc0] sm:$0xff] %vm789, %v850
          %883 = vst.msk [vmem:[%s204 + $0xc8] sm:$0xff] %vm789, %v851
          %884 = vst.msk [vmem:[%s204 + $0xd0] sm:$0xff] %vm789, %v852
          %885 = vst.msk [vmem:[%s204 + $0xd8] sm:$0xff] %vm789, %v853
          %886 = vst.msk [vmem:[%s204 + $0xe0] sm:$0xff] %vm789, %v854
          %887 = vst.msk [vmem:[%s204 + $0xe8] sm:$0xff] %vm789, %v855
          %888 = vst.msk [vmem:[%s204 + $0xf0] sm:$0xff] %vm789, %v856
          %889 = vst.msk [vmem:[%s204 + $0xf8] sm:$0xff] %vm789, %v857
        $region40: #{tpu_custom_call.1} parent=27 // pred_fallthru
          _
        %s890 = smul.u32 32, %s20
        %p891 = scmp.lt.s32.totalorder %s890, 63
        %s892 = scalar_select %p891, %s890, 63
        %s893 = smul.addr %s892, 8
        %s894 = scalar_lea.vmem %s2, %s893
        // Predicated region
        $region41: #{tpu_custom_call.1} parent=27 // pred_check
          %p895 = pneg %p100
        $region42: #{tpu_custom_call.1} parent=27 // pred_check_branch
          %897 = sbr.rel (%p895) target = $region44
        $region43: #{tpu_custom_call.1} parent=27 // pred_region
          %s898 = smul.u32 32, %s20
        $region44: #{tpu_custom_call.1} parent=27 // pred_fallthru
          _
      $region28: #{tpu_custom_call.1} parent=5 // pred_fallthru
        _
      %p899 = scmp.le.s32.totalorder 2, %s11
      // Predicated region
      $region45: #{tpu_custom_call.1} parent=5 // pred_check
        %p900 = pneg %p899
      $region46: #{tpu_custom_call.1} parent=5 // pred_check_branch
        %902 = sbr.rel (%p900) target = $region48
      $region47: #{tpu_custom_call.1} parent=5 // pred_region
        %s903 = ssub.s32 %s11, 2
        // Predicated region
        $region49: #{tpu_custom_call.1} parent=47 // pred_check
          %p904 = pneg %p106
        $region50: #{tpu_custom_call.1} parent=47 // pred_check_branch
          %906 = sbr.rel (%p904) target = $region52
        $region51: #{tpu_custom_call.1} parent=47 // pred_region
          %s907 = smul.u32 32, %s22
          %p908 = scmp.lt.s32.totalorder %s907, 63
          %s909 = scalar_select %p908, %s907, 63
          %s910 = smul.addr %s909, 8
          %s911 = scalar_lea.vmem %s2, %s910
        $region52: #{tpu_custom_call.1} parent=47 // pred_fallthru
          _
      $region48: #{tpu_custom_call.1} parent=5 // pred_fallthru
        _
    $region6: #{tpu_custom_call.1} parent=1 // loop_footer
      %s15 = sadd.s32 1, %s11
    $region7: #{tpu_custom_call.1} parent=1 // loop_footer_branch
      %10 = sbr.rel target = $region3
    $region8: #{tpu_custom_call.1} parent=1 // loop_exit
      _
    %912 = vsyncpa [#allocation4], 1
    %s913 = scalar_lea.sflag [#allocation4], 1
    %914 = vsyncpa %s913, 1

</llo_original>
